<compile_context>
chip_gen: v7x
topology: tpu7x:2x2x1
jax: 0.10.0
libtpu: 0.0.40
codegen_flags: <defaults>
</compile_context>

<pallas_src>
import jax
import jax.numpy as jnp
from jax.experimental import pallas as pl
from jax.experimental.pallas import tpu as pltpu


# ----------------------------------------------------------------------------
# Kernels
# ----------------------------------------------------------------------------
def dense_sigmoid_kernel_inplace(x_ref, w_ref, b_ref, o_ref):
    """f32-output path: accumulate directly into the resident output block."""
    k = pl.program_id(2)

    # Fold the bias into the accumulator init on the first K step.
    @pl.when(k == 0)
    def _():
        o_ref[...] = jnp.broadcast_to(b_ref[...], o_ref.shape)

    # MXU matmul, f32 accumulation.
    o_ref[...] += jnp.dot(
        x_ref[...], w_ref[...], preferred_element_type=jnp.float32
    )

    # Fused f32 epilogue (sigmoid on VPU/EUP) once the K reduction is done.
    @pl.when(k == pl.num_programs(2) - 1)
    def _():
        o_ref[...] = jax.nn.sigmoid(o_ref[...])


def dense_sigmoid_kernel_acc(x_ref, w_ref, b_ref, o_ref, acc_ref):
    """Non-f32-output path: f32 VMEM accumulator, cast on the final store."""
    k = pl.program_id(2)

    @pl.when(k == 0)
    def _():
        acc_ref[...] = jnp.broadcast_to(b_ref[...], acc_ref.shape)

    acc_ref[...] += jnp.dot(
        x_ref[...], w_ref[...], preferred_element_type=jnp.float32
    )

    @pl.when(k == pl.num_programs(2) - 1)
    def _():
        o_ref[...] = jax.nn.sigmoid(acc_ref[...]).astype(o_ref.dtype)


# ----------------------------------------------------------------------------
# Wrapper
# ----------------------------------------------------------------------------
def _round_up(v, m):
    return ((v + m - 1) // m) * m


def our_dense_layer(x, W, b, *, tm=None, tn=None, tk=None, compute_dtype=None):
    """Pallas equivalent of OurDenseLayer.forward: sigmoid(x @ W + b)."""
    batch, d = x.shape
    d_w, n_out = W.shape
    assert d == d_w and b.shape == (1, n_out)

    out_dtype = x.dtype
    out_is_f32 = jnp.dtype(out_dtype) == jnp.dtype(jnp.float32)

    # bf16 MXU operands by default for non-toy shapes (accumulation stays f32;
    # accuracy loss ahead of a sigmoid is negligible).  Tiny shapes (like the
    # test below) stay in f32.
    if compute_dtype is None:
        compute_dtype = jnp.bfloat16 if (d >= 512 and n_out >= 512) else x.dtype
    x = x.astype(compute_dtype)
    W = W.astype(compute_dtype)
    in_itemsize = jnp.dtype(compute_dtype).itemsize
    is_bf16_compute = in_itemsize == 2

    # Alignment targets: sublane-aligned M (mult. of 8), lane-dense N/K
    # (mult. of 128).
    m_al = _round_up(batch, 8)
    n_al = _round_up(n_out, 128)
    k_al = _round_up(d, 128)

    # Tile sizes.  Caps chosen so the double-buffered working set (computed
    # below) stays well under v7x's 64 MiB physical VMEM with headroom.
    if tm is None:
        tm = min(m_al, 1024 if is_bf16_compute else 512)
    if tn is None:
        tn = min(n_al, 1024 if is_bf16_compute else 512)
    if tk is None:
        tk = min(k_al, 2048 if is_bf16_compute else 1024)

    # v7x has 2 TensorCores: with a single M tile, split N into >=2 tiles so
    # the "parallel" j axis gives both cores work (no-op on v5e/v6e).
    if tm >= m_al and n_al >= 2 * 128:
        tn = min(tn, _round_up(pl.cdiv(n_al, 2), 128))

    M_pad = _round_up(batch, tm)
    N_pad = _round_up(n_out, tn)
    K_pad = _round_up(d, tk)
    grid = (M_pad // tm, N_pad // tn, K_pad // tk)

    # Pad only the dimensions that actually need it.  Zero-padding is exact:
    # zero rows/cols contribute nothing to x @ W; padded bias columns only
    # affect output columns that are sliced away.
    # NOTE: W/b padding is static across calls for fixed weights -- hoist /
    # cache it at the call site when reusing the layer.
    if (M_pad, K_pad) != (batch, d):
        x = jnp.pad(x, ((0, M_pad - batch), (0, K_pad - d)))
    if (K_pad, N_pad) != (d, n_out):
        W = jnp.pad(W, ((0, K_pad - d), (0, N_pad - n_out)))
    b32 = b.astype(jnp.float32)
    if N_pad != n_out:
        b32 = jnp.pad(b32, ((0, 0), (0, N_pad - n_out)))

    # Skinny-M inference regime: the kernel is a pure W stream, so deepen the
    # W pipeline to keep HBM bandwidth saturated behind tiny per-step compute.
    skinny_m_stream = grid[0] == 1 and grid[2] >= 3
    if skinny_m_stream:
        w_bufs = 3
        w_spec = pl.BlockSpec(
            (tk, tn), lambda i, j, k: (k, j), pipeline_mode=pl.Buffered(3)
        )
    else:
        w_bufs = 2
        w_spec = pl.BlockSpec((tk, tn), lambda i, j, k: (k, j))

    # Drop the accumulator scratch when the output is f32: accumulate directly
    # in the resident o_ref block (saves tm*tn*4 bytes of VMEM + a tile copy).
    if out_is_f32:
        kernel = dense_sigmoid_kernel_inplace
        scratch_shapes = []
        acc_bytes = 0
    else:
        kernel = dense_sigmoid_kernel_acc
        scratch_shapes = [pltpu.VMEM((tm, tn), jnp.float32)]
        acc_bytes = tm * tn * 4

    # Explicit VMEM budget (double-buffered inputs/outputs + scratch) with
    # headroom, capped at v7x's 64 MiB physical VMEM.
    vmem_needed = (
        2 * tm * tk * in_itemsize                      # x tiles
        + w_bufs * tk * tn * in_itemsize               # W tiles
        + 2 * tm * tn * jnp.dtype(out_dtype).itemsize  # out tiles
        + acc_bytes                                    # accumulator scratch
        + 2 * 1 * tn * 4                               # bias tiles
    )
    vmem_limit = int(min(max(vmem_needed + (8 << 20), 32 << 20), 64 << 20))

    cost = pl.CostEstimate(
        flops=2 * M_pad * N_pad * K_pad,
        transcendentals=M_pad * N_pad,
        bytes_accessed=(
            M_pad * K_pad * in_itemsize
            + K_pad * N_pad * in_itemsize
            + N_pad * 4
            + M_pad * N_pad * jnp.dtype(out_dtype).itemsize
        ),
    )

    out_padded = pl.pallas_call(
        kernel,
        out_shape=jax.ShapeDtypeStruct((M_pad, N_pad), out_dtype),
        grid_spec=pltpu.PrefetchScalarGridSpec(
            num_scalar_prefetch=0,
            grid=grid,
            in_specs=[
                pl.BlockSpec((tm, tk), lambda i, j, k: (i, k)),
                w_spec,
                pl.BlockSpec((1, tn), lambda i, j, k: (0, j)),
            ],
            out_specs=pl.BlockSpec((tm, tn), lambda i, j, k: (i, j)),
            scratch_shapes=scratch_shapes,
        ),
        compiler_params=pltpu.CompilerParams(
            dimension_semantics=("parallel", "parallel", "arbitrary"),
            vmem_limit_bytes=vmem_limit,
        ),
        cost_estimate=cost,
    )(x, W, b32)

    return out_padded[:batch, :n_out]


# ----------------------------------------------------------------------------
# Test
# ----------------------------------------------------------------------------
if __name__ == "__main__":
    # Deterministic synthetic parameters / inputs (mirrors torch.rand init,
    # i.e. uniform [0, 1)), at small shapes matching the original module.
    n_output_nodes = 3
    batch, d = 2, 8

    key = jax.random.PRNGKey(0)
    kx, kw, kb = jax.random.split(key, 3)
    x = jax.random.uniform(kx, (batch, d), dtype=jnp.float32)
    W = jax.random.uniform(kw, (d, n_output_nodes), dtype=jnp.float32)
    b = jax.random.uniform(kb, (1, n_output_nodes), dtype=jnp.float32)

    out = our_dense_layer(x, W, b)
    jax.block_until_ready(out)

    # Pure-JAX reference check.
    ref = jax.nn.sigmoid(x @ W + b)
    assert out.shape == ref.shape, (out.shape, ref.shape)
    assert jnp.allclose(out, ref, atol=1e-5, rtol=1e-5), (out, ref)

    print("KERNEL_OK")
</pallas_src>

<mosaic_0001>
module attributes {stable_mosaic.version = 11 : i64} {
  func.func @dense_sigmoid_kernel_inplace(%arg0: i32, %arg1: i32, %arg2: i32, %arg3: memref<8x128xf32, #tpu.memory_space<vmem>>, %arg4: memref<128x128xf32, #tpu.memory_space<vmem>>, %arg5: memref<1x128xf32, #tpu.memory_space<vmem>>, %arg6: memref<8x128xf32, #tpu.memory_space<vmem>>) attributes {dimension_semantics = [#tpu.dimension_semantics<parallel>, #tpu.dimension_semantics<parallel>, #tpu.dimension_semantics<arbitrary>], iteration_bounds = array<i64: 1, 1, 1>, scalar_prefetch = 0 : i64, scratch_operands = 0 : i64, tpu.core_type = #tpu.core_type<tc>, window_params = [{transform_indices = @transform_0, window_bounds = array<i64: 8, 128>}, {transform_indices = @transform_1, window_bounds = array<i64: 128, 128>}, {transform_indices = @transform_2, window_bounds = array<i64: 1, 128>}, {transform_indices = @transform_3, window_bounds = array<i64: 8, 128>}]} {
    %c0_i32 = arith.constant 0 : i32
    %0 = arith.cmpi eq, %arg2, %c0_i32 : i32
    %1 = arith.extui %0 : i1 to i32
    %c0_i32_0 = arith.constant 0 : i32
    %2 = arith.cmpi ne, %1, %c0_i32_0 : i32
    scf.if %2 {
      %c0_10 = arith.constant 0 : index
      %c0_11 = arith.constant 0 : index
      %12 = vector.load %arg5[%c0_10, %c0_11] : memref<1x128xf32, #tpu.memory_space<vmem>>, vector<1x128xf32>
      %13 = vector.shape_cast %12 : vector<1x128xf32> to vector<1x128xf32>
      %14 = vector.broadcast %13 : vector<1x128xf32> to vector<8x128xf32>
      %c0_12 = arith.constant 0 : index
      %c0_13 = arith.constant 0 : index
      %15 = vector.load %arg6[%c0_12, %c0_13] : memref<8x128xf32, #tpu.memory_space<vmem>>, vector<8x128xf32>
      tpu.vector_store %arg6[%c0_12, %c0_13], %14 {strides = array<i32>} : memref<8x128xf32, #tpu.memory_space<vmem>>, vector<8x128xf32>,
    } else {
    }
    %c0 = arith.constant 0 : index
    %c0_1 = arith.constant 0 : index
    %3 = vector.load %arg6[%c0, %c0_1] : memref<8x128xf32, #tpu.memory_space<vmem>>, vector<8x128xf32>
    %c0_2 = arith.constant 0 : index
    %c0_3 = arith.constant 0 : index
    %4 = vector.load %arg3[%c0_2, %c0_3] : memref<8x128xf32, #tpu.memory_space<vmem>>, vector<8x128xf32>
    %c0_4 = arith.constant 0 : index
    %c0_5 = arith.constant 0 : index
    %5 = vector.load %arg4[%c0_4, %c0_5] : memref<128x128xf32, #tpu.memory_space<vmem>>, vector<128x128xf32>
    %cst = arith.constant dense<0.000000e+00> : vector<8x128xf32>
    %6 = tpu.matmul %4, %5, %cst {dimension_numbers = #tpu.dot_dimension_numbers<[1], [0], [0], [1], [0, 0, 1, 1], [], []>} : vector<8x128xf32>, vector<128x128xf32>, vector<8x128xf32> -> vector<8x128xf32>
    %7 = arith.addf %3, %6 : vector<8x128xf32>
    %c0_6 = arith.constant 0 : index
    %c0_7 = arith.constant 0 : index
    %8 = vector.load %arg6[%c0_6, %c0_7] : memref<8x128xf32, #tpu.memory_space<vmem>>, vector<8x128xf32>
    tpu.vector_store %arg6[%c0_6, %c0_7], %7 {strides = array<i32>} : memref<8x128xf32, #tpu.memory_space<vmem>>, vector<8x128xf32>,
    %c0_i32_8 = arith.constant 0 : i32
    %9 = arith.cmpi eq, %arg2, %c0_i32_8 : i32
    %10 = arith.extui %9 : i1 to i32
    %c0_i32_9 = arith.constant 0 : i32
    %11 = arith.cmpi ne, %10, %c0_i32_9 : i32
    scf.if %11 {
      %c0_10 = arith.constant 0 : index
      %c0_11 = arith.constant 0 : index
      %12 = vector.load %arg6[%c0_10, %c0_11] : memref<8x128xf32, #tpu.memory_space<vmem>>, vector<8x128xf32>
      %13 = arith.negf %12 : vector<8x128xf32>
      %14 = math.exp %13 : vector<8x128xf32>
      %cst_12 = arith.constant 1.000000e+00 : f32
      %15 = vector.broadcast %cst_12 : f32 to vector<8x128xf32>
      %16 = arith.addf %15, %14 : vector<8x128xf32>
      %17 = arith.divf %15, %16 : vector<8x128xf32>
      %c0_13 = arith.constant 0 : index
      %c0_14 = arith.constant 0 : index
      %18 = vector.load %arg6[%c0_13, %c0_14] : memref<8x128xf32, #tpu.memory_space<vmem>>, vector<8x128xf32>
      tpu.vector_store %arg6[%c0_13, %c0_14], %17 {strides = array<i32>} : memref<8x128xf32, #tpu.memory_space<vmem>>, vector<8x128xf32>,
    } else {
    }
    return
  }
  func.func @transform_0(%arg0: i32, %arg1: i32, %arg2: i32) -> (i32, i32) {
    %c0_i32 = arith.constant 0 : i32
    return %arg0, %arg2 : i32, i32
  }
  func.func @transform_1(%arg0: i32, %arg1: i32, %arg2: i32) -> (i32, i32) {
    %c0_i32 = arith.constant 0 : i32
    return %arg2, %arg1 : i32, i32
  }
  func.func @transform_2(%arg0: i32, %arg1: i32, %arg2: i32) -> (i32, i32) {
    %c0_i32 = arith.constant 0 : i32
    %c0_i32_0 = arith.constant 0 : i32
    return %c0_i32, %arg1 : i32, i32
  }
  func.func @transform_3(%arg0: i32, %arg1: i32, %arg2: i32) -> (i32, i32) {
    %c0_i32 = arith.constant 0 : i32
    return %arg0, %arg1 : i32, i32
  }
}

</mosaic_0001>

<llo_original>
// kernel: tpu_custom_call.1
$region0: #{tpu_custom_call.1}
  #allocation0 [shape = 'u32[]', space=smem, size = 0x4, offset = 0x4, fixed_abs, tag = 'smem constant byte address 0x4 - core index']
  #allocation1 [shape = 'u32[144,128]{1,0:T(1,128)}', space=vmem, size = 0x12000, scoped, tag = 'internal scratch']
  %s0 = inlined_call_operand.hbm [shape: f32[8,128], index: 0, kind: input, shape index: {}]
  %s1 = inlined_call_operand.hbm [shape: f32[128,128], index: 1, kind: input, shape index: {}]
  %s2 = inlined_call_operand.vmem [shape: f32[1,128], index: 2, kind: input, shape index: {}]
  %s3 = inlined_call_operand.hbm [shape: f32[8,128], index: 3, kind: output, shape index: {}]
  %s4 = sld [smem:[#allocation0]]
  $region38: #{tpu_custom_call.1} parent=0
    _
  %s6 = ssub.s32 1, %s4
  %s7 = scalar_select 0, %s6, %s4
  $region1: #{tpu_custom_call.1} parent=0
    #allocation2 [shape = 'u8[4096]{0}', space=vmem, size = 0x1000, scoped, tag = 'input window, operand 0, single buffered']
    #allocation3 [shape = 's32[1]{0}', space=sflag, size = 0x4, scoped, tag = 'scoped memory for tpu_custom_call.1']
    #allocation4 [shape = 's32[1]{0}', space=sflag, size = 0x4, scoped, tag = 'scoped memory for tpu_custom_call.1']
    #allocation5 [shape = 'u8[65536]{0}', space=vmem, size = 0x10000, scoped, tag = 'input window, operand 1, single buffered']
    #allocation6 [shape = 's32[1]{0}', space=sflag, size = 0x4, scoped, tag = 'scoped memory for tpu_custom_call.1']
    #allocation7 [shape = 'u8[4096]{0}', space=vmem, size = 0x1000, scoped, tag = 'output window, operand 0, single buffered']
    %8 = vsyncpa [#allocation3], 0
    %9 = vsyncpa [#allocation6], 0
    %10 = vsyncpa [#allocation4], 0
    // Predicated region
    $region2: #{tpu_custom_call.1} parent=1 // pred_check
      _
    $region3: #{tpu_custom_call.1} parent=1 // pred_check_branch
      %12 = sbr.rel (0) target = $region5
    $region4: #{tpu_custom_call.1} parent=1 // pred_region
      %s14 = ssub.s32 128, 128
      %15 = vsyncadd [#allocation3], %s14
      %s17 = sshll.u32 [#allocation2], 4
      %s18 = int_to_ptr.vmem [resolvable:$true] %s17
      %20 = dma.hbm_to_vmem [thread:$0]  %s0, 128, %s18, [#allocation3]
    $region5: #{tpu_custom_call.1} parent=1 // pred_fallthru
      _
    // Predicated region
    $region6: #{tpu_custom_call.1} parent=1 // pred_check
      _
    $region7: #{tpu_custom_call.1} parent=1 // pred_check_branch
      %22 = sbr.rel (0) target = $region9
    $region8: #{tpu_custom_call.1} parent=1 // pred_region
      %s24 = ssub.s32 2048, 2048
      %25 = vsyncadd [#allocation6], %s24
      %s26 = sshll.u32 [#allocation5], 4
      %s27 = int_to_ptr.vmem [resolvable:$true] %s26
      %32 = dma.hbm_to_vmem [thread:$0]  %s1, 2048, %s27, [#allocation6], 128, 128, 8
    $region9: #{tpu_custom_call.1} parent=1 // pred_fallthru
      _
    // Predicated region
    $region10: #{tpu_custom_call.1} parent=1 // pred_check
      _
    $region11: #{tpu_custom_call.1} parent=1 // pred_check_branch
      %34 = sbr.rel (0) target = $region13
    $region12: #{tpu_custom_call.1} parent=1 // pred_region
      _
    $region13: #{tpu_custom_call.1} parent=1 // pred_fallthru
      _
    // Predicated region
    $region14: #{tpu_custom_call.1} parent=1 // pred_check
      _
    $region15: #{tpu_custom_call.1} parent=1 // pred_check_branch
      %36 = sbr.rel (0) target = $region17
    $region16: #{tpu_custom_call.1} parent=1 // pred_region
      %37 = dma.done [#allocation3], 128
    $region17: #{tpu_custom_call.1} parent=1 // pred_fallthru
      _
    // Predicated region
    $region18: #{tpu_custom_call.1} parent=1 // pred_check
      _
    $region19: #{tpu_custom_call.1} parent=1 // pred_check_branch
      %39 = sbr.rel (0) target = $region21
    $region20: #{tpu_custom_call.1} parent=1 // pred_region
      %40 = dma.done [#allocation6], 2048
    $region21: #{tpu_custom_call.1} parent=1 // pred_fallthru
      _
    %p41 = scmp.eq.s32.totalorder 0, 0
    // Predicated region
    $region22: #{tpu_custom_call.1} parent=1 // pred_check
      %p42 = pneg %p41
    $region23: #{tpu_custom_call.1} parent=1 // pred_check_branch
      %44 = sbr.rel (%p42) target = $region25
    $region24: #{tpu_custom_call.1} parent=1 // pred_region
      %v45 = vld [vmem:[%s2] sm:$0x1]
      %v47 = vlaneseq
      %v48 = vshrl.u32 %v47, 7
      %v49 = vsub.s32 0, %v48
      %v50 = vrot.slane %v45, %v49
      %52 = vst [vmem:[#allocation7] sm:$0xff] %v50
    $region25: #{tpu_custom_call.1} parent=1 // pred_fallthru
      _
    %v53 = vld [vmem:[#allocation7] sm:$0xff]
    %v54 = vld [vmem:[#allocation2] sm:$0xff]
    %v55 = vld [vmem:[#allocation5] sm:$0xff]
    %v56 = vld [vmem:[#allocation5 + $0x8] sm:$0xff]
    %v57 = vld [vmem:[#allocation5 + $0x10] sm:$0xff]
    %v58 = vld [vmem:[#allocation5 + $0x18] sm:$0xff]
    %v59 = vld [vmem:[#allocation5 + $0x20] sm:$0xff]
    %v60 = vld [vmem:[#allocation5 + $0x28] sm:$0xff]
    %v61 = vld [vmem:[#allocation5 + $0x30] sm:$0xff]
    %v62 = vld [vmem:[#allocation5 + $0x38] sm:$0xff]
    %v63 = vld [vmem:[#allocation5 + $0x40] sm:$0xff]
    %v64 = vld [vmem:[#allocation5 + $0x48] sm:$0xff]
    %v65 = vld [vmem:[#allocation5 + $0x50] sm:$0xff]
    %v66 = vld [vmem:[#allocation5 + $0x58] sm:$0xff]
    %v67 = vld [vmem:[#allocation5 + $0x60] sm:$0xff]
    %v68 = vld [vmem:[#allocation5 + $0x68] sm:$0xff]
    %v69 = vld [vmem:[#allocation5 + $0x70] sm:$0xff]
    %v70 = vld [vmem:[#allocation5 + $0x78] sm:$0xff]
    %71 = vmatprep.subr.mxu0 0.0
    %72 = vmatpush1.msra.mxu0 %v55
    %73 = vmatprep.subr.mxu0 0.0
    %74 = vmatpush1.msra.mxu0 %v56
    %75 = vmatprep.subr.mxu0 0.0
    %76 = vmatpush1.msra.mxu0 %v57
    %77 = vmatprep.subr.mxu0 0.0
    %78 = vmatpush1.msra.mxu0 %v58
    %79 = vmatprep.subr.mxu0 0.0
    %80 = vmatpush1.msra.mxu0 %v59
    %81 = vmatprep.subr.mxu0 0.0
    %82 = vmatpush1.msra.mxu0 %v60
    %83 = vmatprep.subr.mxu0 0.0
    %84 = vmatpush1.msra.mxu0 %v61
    %85 = vmatprep.subr.mxu0 0.0
    %86 = vmatpush1.msra.mxu0 %v62
    %87 = vmatprep.subr.mxu0 0.0
    %88 = vmatpush1.msra.mxu0 %v63
    %89 = vmatprep.subr.mxu0 0.0
    %90 = vmatpush1.msra.mxu0 %v64
    %91 = vmatprep.subr.mxu0 0.0
    %92 = vmatpush1.msra.mxu0 %v65
    %93 = vmatprep.subr.mxu0 0.0
    %94 = vmatpush1.msra.mxu0 %v66
    %95 = vmatprep.subr.mxu0 0.0
    %96 = vmatpush1.msra.mxu0 %v67
    %97 = vmatprep.subr.mxu0 0.0
    %98 = vmatpush1.msra.mxu0 %v68
    %99 = vmatprep.subr.mxu0 0.0
    %100 = vmatpush1.msra.mxu0 %v69
    %101 = vmatprep.subr.mxu0 0.0
    %102 = vmatpush1.msra.mxu0 %v70
    %103 = vmatprep.subr.mxu0 0.0
    %104 = vmatpush1.msra.mxu0 0.0
    %105 = vmatprep.subr.mxu0 0.0
    %106 = vmatpush1.msra.mxu0 0.0
    %107 = vmatprep.subr.mxu0 0.0
    %108 = vmatpush1.msra.mxu0 0.0
    %109 = vmatprep.subr.mxu0 0.0
    %110 = vmatpush1.msra.mxu0 0.0
    %111 = vmatprep.subr.mxu0 0.0
    %112 = vmatpush1.msra.mxu0 0.0
    %113 = vmatprep.subr.mxu0 0.0
    %114 = vmatpush1.msra.mxu0 0.0
    %115 = vmatprep.subr.mxu0 0.0
    %116 = vmatpush1.msra.mxu0 0.0
    %117 = vmatprep.subr.mxu0 0.0
    %118 = vmatpush1.msra.mxu0 0.0
    %119 = vmatprep.subr.mxu0 0.0
    %120 = vmatpush1.msra.mxu0 0.0
    %121 = vmatprep.subr.mxu0 0.0
    %122 = vmatpush1.msra.mxu0 0.0
    %123 = vmatprep.subr.mxu0 0.0
    %124 = vmatpush1.msra.mxu0 0.0
    %125 = vmatprep.subr.mxu0 0.0
    %126 = vmatpush1.msra.mxu0 0.0
    %127 = vmatprep.subr.mxu0 0.0
    %128 = vmatpush1.msra.mxu0 0.0
    %129 = vmatprep.subr.mxu0 0.0
    %130 = vmatpush1.msra.mxu0 0.0
    %131 = vmatprep.subr.mxu0 0.0
    %132 = vmatpush1.msra.mxu0 0.0
    %133 = vmatprep.subr.mxu0 0.0
    %134 = vmatpush1.msra.mxu0 0.0
    %135 = vmatprep.mubr.f32.mxu0 0.0
    %136 = vmatmul.mubr.f32.gmra.mrb[0].mxu0 %v54
    %v137 = vpop.f32.mrb[0].mxu0
    %v138 = vadd.f32 0.0, %v137
    %v139 = vpop.f32.mrb[0].mxu0
    %140 = vdwg.mxu0
    %v141 = vadd.f32 %v53, %v138
    %142 = vst [vmem:[#allocation7] sm:$0xff] %v141
    // Predicated region
    $region26: #{tpu_custom_call.1} parent=1 // pred_check
      %p143 = pneg %p41
    $region27: #{tpu_custom_call.1} parent=1 // pred_check_branch
      %145 = sbr.rel (%p143) target = $region29
    $region28: #{tpu_custom_call.1} parent=1 // pred_region
      %v146 = vld [vmem:[#allocation7] sm:$0xff]
      %v147 = vxor.u32 %v146, 2147483648
      %v148 = vmul.f32 %v147, 1.442695
      %v149 = vpow.pop %v148
      %v150 = vadd.f32 %v149, 1.0
      %v151 = vrcp.pop %v150
      %v152 = vmul.f32 1.0, %v151
      %153 = vst [vmem:[#allocation7] sm:$0xff] %v152
    $region29: #{tpu_custom_call.1} parent=1 // pred_fallthru
      _
    // Predicated region
    $region30: #{tpu_custom_call.1} parent=1 // pred_check
      _
    $region31: #{tpu_custom_call.1} parent=1 // pred_check_branch
      %155 = sbr.rel (0) target = $region33
    $region32: #{tpu_custom_call.1} parent=1 // pred_region
      %s157 = ssub.s32 128, 128
      %158 = vsyncadd [#allocation4], %s157
      %s160 = sshll.u32 [#allocation7], 4
      %s161 = int_to_ptr.vmem [resolvable:$true] %s160
      %163 = dma.vmem_to_hbm [thread:$0]  %s161, 128, %s3, [#allocation4]
    $region33: #{tpu_custom_call.1} parent=1 // pred_fallthru
      _
    // Predicated region
    $region34: #{tpu_custom_call.1} parent=1 // pred_check
      _
    $region35: #{tpu_custom_call.1} parent=1 // pred_check_branch
      %165 = sbr.rel (0) target = $region37
    $region36: #{tpu_custom_call.1} parent=1 // pred_region
      %166 = dma.done [#allocation4], 128
    $region37: #{tpu_custom_call.1} parent=1 // pred_fallthru
      _
    %167 = vsyncpa [#allocation3], 1
    %168 = vsyncpa [#allocation6], 1
    %169 = vsyncpa [#allocation4], 1

</llo_original>
